<compile_context>
chip_gen: v5e
topology: v5e:2x2
jax: 0.10.0
libtpu: 0.0.40
codegen_flags: <defaults>
</compile_context>

<pallas_src>
import math

import jax
import jax.numpy as jnp
from jax.experimental import pallas as pl
from jax.experimental.pallas import tpu as pltpu


# ----------------------------------------------------------------------------
# Pallas kernel: HBM-bound streaming per-row gate.
#   out[r, s0:s1] = x[r, s0:s1] * gate[r]        with r = b*C + c
# Body is 1 vld + 1 vmul + 1 vst per output vreg — the binding resource is the
# HBM DMA, so all tuning lives in the tiling (_pick_tiles), not in this body.
# ----------------------------------------------------------------------------
def _gate_mul_kernel(x_ref, gate_ref, o_ref):
    # gate stays f32; multiply in f32 and cast the product once.
    o_ref[...] = (x_ref[...] * gate_ref[...]).astype(o_ref.dtype)


def _vmem_budget_bytes():
    """Generation-aware usable-VMEM budget (~3/4 of physical per-core VMEM)."""
    cap = 64 << 20  # conservative fallback: v7x per-TensorCore VMEM
    try:
        info = pltpu.get_tpu_info()
        cap = int(getattr(info, "vmem_capacity_bytes", cap))
    except Exception:
        pass
    return (3 * cap) // 4          # ~48 MiB on v7x, ~96 MiB on v5e/v6e


def _pick_tiles(R, S, itemsize, vmem_budget):
    """Row/lane tile for the streaming multiply.

    * rows (B*C) tiled in multiples of the dtype sublane packing (decoupled from C)
    * lanes tiled in multiples of 128 (unmasked vst) unless S < 128 (full dim)
    * byte-targeted (~2-8 MiB input tile) so the double-buffered in+out working
      set stays well inside the generation-aware VMEM budget
    * keeps >= ~8 grid steps so both v7x TensorCores get work and the pipeline
      overlaps DMA with compute
    """
    pack = max(8, 32 // itemsize)          # 8 f32 / 16 bf16 / 32 int8 sublanes
    tile_budget = max(2 << 20, min(8 << 20, vmem_budget // 6))
    tile_elems = max(pack * 128, tile_budget // itemsize)

    if S < 128:
        ts = S                             # full-dim block (exempt from 128 rule)
    else:
        ts = min((S // 128) * 128,
                 max(128, ((tile_elems // pack) // 128) * 128))
    if R <= pack:
        tr = R                             # full-dim block (exempt from 8 rule)
    else:
        tr = min((R // pack) * pack,
                 max(pack, ((tile_elems // ts) // pack) * pack))

    def _steps(tr_, ts_):
        return pl.cdiv(R, tr_) * pl.cdiv(S, ts_)

    # Give megacore sharding and double-buffering something to chew on.
    while _steps(tr, ts) < 8:
        if ts > 128:
            ts = max(128, ((ts // 2) // 128) * 128)
        elif tr > pack:
            tr = max(pack, ((tr // 2) // pack) * pack)
        else:
            break
    return tr, ts


def _conv1d_as_toeplitz(conv_w, channels):
    """Banded (C, C) matrix T such that (proj @ T) == Conv1d(1,1,k,pad=k//2)(proj)."""
    k = conv_w.shape[0]
    pad = k // 2
    i = jnp.arange(channels)[:, None]   # input channel index
    j = jnp.arange(channels)[None, :]   # output channel index
    t = i - j + pad                     # tap index
    taps = conv_w[jnp.clip(t, 0, k - 1)]
    return jnp.where((t >= 0) & (t < k), taps, 0.0).astype(jnp.float32)


def prepare_gate_weights(w_lin, b_lin, conv_w, channels):
    """One-shot (init-time) fold of the channel Conv1d into the linear projection.

    Hoisted out of the forward path: it is a pure function of static weights and
    would otherwise rebuild a CxC matrix and run a cls_dim x C x C matmul per call.
    """
    T = _conv1d_as_toeplitz(conv_w, channels)
    w_eff = w_lin.astype(jnp.float32) @ T        # (cls_dim, C)
    b_eff = b_lin.astype(jnp.float32) @ T        # (1, C)
    return w_eff, b_eff


def efficient_cls_attention(x, cls, w_eff, b_eff, *, tile_r=None, tile_s=None):
    """out = x * sigmoid(conv1d(linear(cls)))[:, :, None, None]"""
    B, C, H, W = x.shape
    R, S = B * C, H * W

    # ---- Gate (tiny): plain XLA matmul + sigmoid, off the streaming path.
    #      M = B rows is far below MXU tiling; a dedicated pallas_call only adds
    #      launch overhead and a scoped-VMEM risk for large cls_dim * C.
    gate = jax.nn.sigmoid(cls.astype(jnp.float32) @ w_eff + b_eff)   # (B, C) f32
    gate2d = gate.reshape(R, 1)

    # ---- Streaming gating multiply over the flattened (B*C, H*W) view.
    x2d = x.reshape(R, S)
    itemsize = jnp.dtype(x.dtype).itemsize
    vmem_budget = _vmem_budget_bytes()
    tr, ts = _pick_tiles(R, S, itemsize, vmem_budget)
    if tile_r is not None:
        tr = tile_r
    if tile_s is not None:
        ts = tile_s
    grid = (pl.cdiv(R, tr), pl.cdiv(S, ts))

    tile_bytes = tr * ts * itemsize
    # 2-deep buffers for the x and out tiles + the tiny gate column + headroom.
    vmem_limit = int(min(max(4 * tile_bytes + (2 << 20), 16 << 20), vmem_budget))

    out2d = pl.pallas_call(
        _gate_mul_kernel,
        out_shape=jax.ShapeDtypeStruct((R, S), x.dtype),
        grid=grid,
        in_specs=[
            # x tile: lane-dense, 128-multiple (or full-S) lanes.
            pl.BlockSpec((tr, ts), lambda r, s: (r, s)),
            # Per-row gate; block index independent of s, so its tiny DMA is not
            # re-issued across spatial tiles.  (pipeline_mode=pl.Buffered(3) on
            # the x spec is a further optional few-% DMA-jitter knob.)
            pl.BlockSpec((tr, 1), lambda r, s: (r, 0)),
        ],
        out_specs=pl.BlockSpec((tr, ts), lambda r, s: (r, s)),
        compiler_params=pltpu.CompilerParams(
            dimension_semantics=("parallel", "parallel"),
            vmem_limit_bytes=vmem_limit,
        ),
        cost_estimate=pl.CostEstimate(
            flops=R * S,
            transcendentals=0,
            bytes_accessed=2 * R * S * itemsize + R * 4,
        ),
    )(x2d, gate2d)
    return out2d.reshape(B, C, H, W)


def make_params(cls_dim, channels, gamma=2, b=1, key=None):
    """Deterministic synthetic parameters matching the module's shapes."""
    k = int(abs(math.log2(channels) / gamma + b / gamma))
    k = k if k % 2 else k + 1
    k_w, k_b, k_c = jax.random.split(key, 3)
    if cls_dim != channels:
        bound = 1.0 / math.sqrt(cls_dim)
        w_lin = jax.random.uniform(k_w, (cls_dim, channels), jnp.float32, -bound, bound)
        b_lin = jax.random.uniform(k_b, (1, channels), jnp.float32, -bound, bound)
    else:
        # nn.Identity() branch
        w_lin = jnp.eye(channels, dtype=jnp.float32)
        b_lin = jnp.zeros((1, channels), jnp.float32)
    cbound = 1.0 / math.sqrt(k)
    conv_w = jax.random.uniform(k_c, (k,), jnp.float32, -cbound, cbound)
    return w_lin, b_lin, conv_w


def reference(x, cls, w_lin, b_lin, conv_w):
    """Plain-JAX reference mirroring the PyTorch forward."""
    proj = cls @ w_lin + b_lin
    k = conv_w.shape[0]
    pad = k // 2
    C = proj.shape[1]
    padded = jnp.pad(proj, ((0, 0), (pad, pad)))
    conv = sum(conv_w[i] * padded[:, i:i + C] for i in range(k))
    attn = jax.nn.sigmoid(conv)
    return x * attn[:, :, None, None]


if __name__ == "__main__":
    B, cls_dim, channels, H, W = 2, 16, 8, 16, 16   # k -> 3 for channels=8

    key = jax.random.PRNGKey(0)
    kx, kc, kp = jax.random.split(key, 3)
    x = jax.random.normal(kx, (B, channels, H, W), jnp.float32)
    cls = jax.random.normal(kc, (B, cls_dim), jnp.float32)
    w_lin, b_lin, conv_w = make_params(cls_dim, channels, key=kp)

    # One-shot (init-time) fold of the Conv1d into the linear projection.
    w_eff, b_eff = prepare_gate_weights(w_lin, b_lin, conv_w, channels)

    # Main check: S = 256 -> (tile_r, tile_s) = (8, 128), grid (2, 2).
    out = efficient_cls_attention(x, cls, w_eff, b_eff)
    out = jax.block_until_ready(out)
    ref = reference(x, cls, w_lin, b_lin, conv_w)
    assert out.shape == (B, channels, H, W)
    assert jnp.allclose(out, ref, rtol=1e-5, atol=1e-5), "mismatch vs reference"

    # Second check: spatial extent NOT a multiple of 128 exercises the
    # partial-last-block (pl.cdiv) path of the streaming kernel.
    H2 = W2 = 12                                     # S = 144
    x2 = jax.random.normal(kx, (B, channels, H2, W2), jnp.float32)
    out2 = jax.block_until_ready(efficient_cls_attention(x2, cls, w_eff, b_eff))
    ref2 = reference(x2, cls, w_lin, b_lin, conv_w)
    assert jnp.allclose(out2, ref2, rtol=1e-5, atol=1e-5), "mismatch (partial block)"

    print("KERNEL_OK")
</pallas_src>

<mosaic_0001>
module attributes {stable_mosaic.version = 11 : i64} {
  func.func @_gate_mul_kernel(%arg0: i32, %arg1: i32, %arg2: memref<8x128xf32, #tpu.memory_space<vmem>>, %arg3: memref<8x1xf32, #tpu.memory_space<vmem>>, %arg4: memref<8x128xf32, #tpu.memory_space<vmem>>) attributes {dimension_semantics = [#tpu.dimension_semantics<parallel>, #tpu.dimension_semantics<parallel>], iteration_bounds = array<i64: 2, 2>, scalar_prefetch = 0 : i64, scratch_operands = 0 : i64, tpu.core_type = #tpu.core_type<tc>, window_params = [{transform_indices = @transform_0, window_bounds = array<i64: 8, 128>}, {transform_indices = @transform_1, window_bounds = array<i64: 8, 1>}, {transform_indices = @transform_2, window_bounds = array<i64: 8, 128>}]} {
    %c0 = arith.constant 0 : index
    %c0_0 = arith.constant 0 : index
    %0 = vector.load %arg2[%c0, %c0_0] : memref<8x128xf32, #tpu.memory_space<vmem>>, vector<8x128xf32>
    %c0_1 = arith.constant 0 : index
    %c0_2 = arith.constant 0 : index
    %1 = vector.load %arg3[%c0_1, %c0_2] : memref<8x1xf32, #tpu.memory_space<vmem>>, vector<8x1xf32>
    %2 = vector.broadcast %1 : vector<8x1xf32> to vector<8x128xf32>
    %3 = arith.mulf %0, %2 : vector<8x128xf32>
    %c0_3 = arith.constant 0 : index
    %c0_4 = arith.constant 0 : index
    %4 = vector.load %arg4[%c0_3, %c0_4] : memref<8x128xf32, #tpu.memory_space<vmem>>, vector<8x128xf32>
    tpu.vector_store %arg4[%c0_3, %c0_4], %3 {strides = array<i32>} : memref<8x128xf32, #tpu.memory_space<vmem>>, vector<8x128xf32>,
    return
  }
  func.func @transform_0(%arg0: i32, %arg1: i32) -> (i32, i32) {
    %c0_i32 = arith.constant 0 : i32
    return %arg0, %arg1 : i32, i32
  }
  func.func @transform_1(%arg0: i32, %arg1: i32) -> (i32, i32) {
    %c0_i32 = arith.constant 0 : i32
    %c0_i32_0 = arith.constant 0 : i32
    return %arg0, %c0_i32 : i32, i32
  }
  func.func @transform_2(%arg0: i32, %arg1: i32) -> (i32, i32) {
    %c0_i32 = arith.constant 0 : i32
    return %arg0, %arg1 : i32, i32
  }
}

</mosaic_0001>

<llo_original>
// kernel: tpu_custom_call.1
$region0: #{tpu_custom_call.1}
  #allocation0 [shape = 'u32[]', space=smem, size = 0x4, offset = 0x4, fixed_abs, tag = 'smem constant byte address 0x4 - core index']
  #allocation1 [shape = 'u32[72,128]{1,0:T(1,128)}', space=vmem, size = 0x9000, scoped, tag = 'internal scratch']
  %s0 = inlined_call_operand.hbm [shape: f32[16,256], index: 0, kind: input, shape index: {}]
  %s1 = inlined_call_operand.vmem [shape: f32[16,1], index: 1, kind: input, shape index: {}]
  %s2 = inlined_call_operand.hbm [shape: f32[16,256], index: 2, kind: output, shape index: {}]
  %s3 = sld [smem:[#allocation0]]
  $region45: #{tpu_custom_call.1} parent=0
    _
  %s5 = ssub.s32 1, %s3
  %s6 = scalar_select 0, %s5, %s3
  $region1: #{tpu_custom_call.1} parent=0
    #allocation2 [shape = 'u8[8192]{0}', space=vmem, size = 0x2000, scoped, tag = 'input window, operand 0']
    #allocation3 [shape = 's32[2]{0}', space=sflag, size = 0x8, scoped, tag = 'scoped memory for tpu_custom_call.1']
    #allocation4 [shape = 's32[2]{0}', space=sflag, size = 0x8, scoped, tag = 'scoped memory for tpu_custom_call.1']
    #allocation5 [shape = 'u8[8192]{0}', space=vmem, size = 0x2000, scoped, tag = 'output window, operand 0']
    %7 = vsyncpa [#allocation3], 0
    %s8 = scalar_lea.sflag [#allocation3], 1
    %9 = vsyncpa %s8, 0
    %10 = vsyncpa [#allocation4], 0
    %s11 = scalar_lea.sflag [#allocation4], 1
    %12 = vsyncpa %s11, 0
    loop: start=0, step=1, limit=6
    $region2: #{tpu_custom_call.1} parent=1 // loop_pre_header
      _
    $region3: #{tpu_custom_call.1} parent=1 // loop_header
      %s14 = sphi 0, %s18
      %p15 = scmp.ge.s32.totalorder %s14, 6
      %s21 = sphi 0, %s33
      %s22 = sphi 0, %s29
      %s23 = sphi 0, %s21
      %s24 = sphi 0, %s22
      %s25 = sphi 0, %s23
      %s26 = sphi 0, %s24
      %s38 = sphi 0, %s40
      %s41 = sphi 0, %s38
      %s42 = sphi 0, %s41
      %s58 = sphi 0, %s42
      %s64 = sphi 0, %s66
      %s67 = sphi 0, %s64
      %s68 = sphi 0, %s67
      %s84 = sphi 0, %s68
      %s92 = sphi 0, %s94
      %s95 = sphi 0, %s92
      %s96 = sphi 0, %s95
      %s112 = sphi 0, %s96
    $region4: #{tpu_custom_call.1} parent=1 // loop_header_branch
      %17 = sbr.rel (%p15) target = $region8
    $region5: #{tpu_custom_call.1} parent=1 // loop_body
      %s19 = ssub.s32 %s14, 1
      %s20 = ssub.s32 %s14, 2
      %s27 = sadd.s32 1, %s22
      %p28 = scmp.ge.s32.totalorder %s27, 2
      %s29 = scalar_select %p28, 0, %s27
      %s30 = sadd.s32 1, %s21
      %s31 = scalar_select %p28, %s30, %s21
      %p32 = scmp.ge.s32.totalorder %s31, 2
      %s33 = scalar_select %p32, 0, %s31
      %s34 = ssub.s32 %s21, %s33
      %s35 = ssub.s32 %s22, %s29
      %s36 = sor.u32 %s34, %s35
      %p37 = scmp.eq.s32.totalorder %s36, 0
      %s39 = sadd.s32 %s38, 1
      %s40 = scalar_select %p37, %s38, %s39
      %p43 = pneg %p37
      %p44 = scmp.eq.s32.totalorder %s14, 3
      %p45 = por %p43, %p44
      %p46 = scmp.ne.s32.totalorder %s38, %s41
      %p47 = scmp.eq.s32.totalorder %s14, 0
      %p48 = por %p46, %p47
      %p49 = scmp.ne.s32.totalorder %s38, %s41
      %p50 = scmp.eq.s32.totalorder %s19, 3
      %p51 = por %p49, %p50
      %p52 = scmp.ne.s32.totalorder %s41, %s42
      %p53 = scmp.eq.s32.totalorder %s19, 0
      %p54 = por %p52, %p53
      %p55 = scmp.ne.s32.totalorder %s41, %s42
      %p56 = scmp.eq.s32.totalorder %s20, 3
      %p57 = por %p55, %p56
      %p59 = scmp.ne.s32.totalorder %s42, %s58
      %p60 = scmp.eq.s32.totalorder %s20, 0
      %p61 = por %p59, %p60
      %s62 = ssub.s32 %s21, %s33
      %p63 = scmp.eq.s32.totalorder %s62, 0
      %s65 = sadd.s32 %s64, 1
      %s66 = scalar_select %p63, %s64, %s65
      %p69 = pneg %p63
      %p70 = scmp.eq.s32.totalorder %s14, 3
      %p71 = por %p69, %p70
      %p72 = scmp.ne.s32.totalorder %s64, %s67
      %p73 = scmp.eq.s32.totalorder %s14, 0
      %p74 = por %p72, %p73
      %p75 = scmp.ne.s32.totalorder %s64, %s67
      %p76 = scmp.eq.s32.totalorder %s19, 3
      %p77 = por %p75, %p76
      %p78 = scmp.ne.s32.totalorder %s67, %s68
      %p79 = scmp.eq.s32.totalorder %s19, 0
      %p80 = por %p78, %p79
      %p81 = scmp.ne.s32.totalorder %s67, %s68
      %p82 = scmp.eq.s32.totalorder %s20, 3
      %p83 = por %p81, %p82
      %p85 = scmp.ne.s32.totalorder %s68, %s84
      %p86 = scmp.eq.s32.totalorder %s20, 0
      %p87 = por %p85, %p86
      %s88 = ssub.s32 %s21, %s33
      %s89 = ssub.s32 %s22, %s29
      %s90 = sor.u32 %s88, %s89
      %p91 = scmp.eq.s32.totalorder %s90, 0
      %s93 = sadd.s32 %s92, 1
      %s94 = scalar_select %p91, %s92, %s93
      %p97 = pneg %p91
      %p98 = scmp.eq.s32.totalorder %s14, 3
      %p99 = por %p97, %p98
      %p100 = scmp.ne.s32.totalorder %s92, %s95
      %p101 = scmp.eq.s32.totalorder %s14, 0
      %p102 = por %p100, %p101
      %p103 = scmp.ne.s32.totalorder %s92, %s95
      %p104 = scmp.eq.s32.totalorder %s19, 3
      %p105 = por %p103, %p104
      %p106 = scmp.ne.s32.totalorder %s95, %s96
      %p107 = scmp.eq.s32.totalorder %s19, 0
      %p108 = por %p106, %p107
      %p109 = scmp.ne.s32.totalorder %s95, %s96
      %p110 = scmp.eq.s32.totalorder %s20, 3
      %p111 = por %p109, %p110
      %p113 = scmp.ne.s32.totalorder %s96, %s112
      %p114 = scmp.eq.s32.totalorder %s20, 0
      %p115 = por %p113, %p114
      %p116 = scmp.le.s32.totalorder 1, %s14
      %p117 = scmp.lt.s32.totalorder %s14, 5
      %p118 = pnand %p116, %p117
      %p119 = pneg %p118
      // Predicated region
      $region9: #{tpu_custom_call.1} parent=5 // pred_check
        _
      $region10: #{tpu_custom_call.1} parent=5 // pred_check_branch
        %121 = sbr.rel (%p118) target = $region12
      $region11: #{tpu_custom_call.1} parent=5 // pred_region
        %s122 = ssub.s32 %s14, 1
      $region12: #{tpu_custom_call.1} parent=5 // pred_fallthru
        _
      %p123 = scmp.lt.s32.totalorder %s14, 4
      // Predicated region
      $region13: #{tpu_custom_call.1} parent=5 // pred_check
        %p124 = pneg %p123
      $region14: #{tpu_custom_call.1} parent=5 // pred_check_branch
        %126 = sbr.rel (%p124) target = $region16
      $region15: #{tpu_custom_call.1} parent=5 // pred_region
        // Predicated region
        $region17: #{tpu_custom_call.1} parent=15 // pred_check
          %p127 = pneg %p48
        $region18: #{tpu_custom_call.1} parent=15 // pred_check_branch
          %129 = sbr.rel (%p127) target = $region20
        $region19: #{tpu_custom_call.1} parent=15 // pred_region
          %s130 = sand.u32 %s38, 1
          %s131 = scalar_lea.sflag [#allocation3], %s130
          %s132 = sand.u32 %s38, 1
          %s133 = smul.addr %s132, 8
          %s134 = scalar_lea.vmem [#allocation2], %s133
          %136 = vsyncadd %s131, 0
          %s137 = smul.addr %s21, 2
          %s138 = sadd.s32 %s22, %s137
          %s139 = smul.addr %s138, 8
          %s140 = scalar_lea.hbm %s0, %s139
          %s142 = sshll.u32 %s140, 4
          %s143 = int_to_ptr.hbm [resolvable:$true] %s142
          %s144 = sshll.u32 %s134, 4
          %s145 = int_to_ptr.vmem [resolvable:$true] %s144
          %147 = dma.hbm_to_vmem [thread:$0]  %s143, 128, %s145, %s131
        $region20: #{tpu_custom_call.1} parent=15 // pred_fallthru
          _
        // Predicated region
        $region21: #{tpu_custom_call.1} parent=15 // pred_check
          %p148 = pneg %p74
        $region22: #{tpu_custom_call.1} parent=15 // pred_check_branch
          %150 = sbr.rel (%p148) target = $region24
        $region23: #{tpu_custom_call.1} parent=15 // pred_region
          %p151 = scmp.lt.s32.totalorder %s21, 1
          %s152 = scalar_select %p151, %s21, 1
          %s153 = smul.addr %s152, 8
          %s154 = scalar_lea.vmem %s1, %s153
        $region24: #{tpu_custom_call.1} parent=15 // pred_fallthru
          _
      $region16: #{tpu_custom_call.1} parent=5 // pred_fallthru
        _
      %p155 = scmp.le.s32.totalorder 1, %s14
      %p156 = scmp.lt.s32.totalorder %s14, 5
      %p157 = pnand %p155, %p156
      %p158 = pneg %p157
      // Predicated region
      $region25: #{tpu_custom_call.1} parent=5 // pred_check
        _
      $region26: #{tpu_custom_call.1} parent=5 // pred_check_branch
        %160 = sbr.rel (%p157) target = $region28
      $region27: #{tpu_custom_call.1} parent=5 // pred_region
        %s161 = ssub.s32 %s14, 1
        %s162 = sand.u32 %s41, 1
        %s163 = scalar_lea.sflag [#allocation3], %s162
        %s164 = sand.u32 %s41, 1
        %s165 = smul.addr %s164, 8
        %s166 = scalar_lea.vmem [#allocation2], %s165
        // Predicated region
        $region29: #{tpu_custom_call.1} parent=27 // pred_check
          %p167 = pneg %p54
        $region30: #{tpu_custom_call.1} parent=27 // pred_check_branch
          %169 = sbr.rel (%p167) target = $region32
        $region31: #{tpu_custom_call.1} parent=27 // pred_region
          %171 = dma.done %s163, 128
        $region32: #{tpu_custom_call.1} parent=27 // pred_fallthru
          _
        %s172 = sand.u32 %s41, 1
        %s173 = scalar_lea.sflag [#allocation3], %s172
        %s174 = sand.u32 %s41, 1
        %s175 = smul.addr %s174, 8
        %s176 = scalar_lea.vmem [#allocation2], %s175
        %p177 = pneg %p54
        %p178 = pneg %p51
        %p179 = scmp.lt.s32.totalorder %s23, 1
        %s180 = scalar_select %p179, %s23, 1
        %s181 = smul.addr %s180, 8
        %s182 = scalar_lea.vmem %s1, %s181
        %p183 = pneg %p80
        %p184 = pneg %p77
        %p185 = pneg %p108
        %p186 = pneg %p105
        %s187 = sand.u32 %s95, 1
        %s188 = scalar_lea.sflag [#allocation4], %s187
        %s189 = sand.u32 %s95, 1
        %s190 = smul.addr %s189, 8
        %s191 = scalar_lea.vmem [#allocation5], %s190
        %p192 = scmp.lt.s32.totalorder %s23, 1
        %s193 = scalar_select %p192, %s23, 1
        %s194 = smul.addr %s193, 8
        %s195 = scalar_lea.vmem %s1, %s194
        %v196 = vld [vmem:[%s166] sm:$0xff]
        %v197 = vld [vmem:[%s195] sm:$0xff]
        %199 = vset.pattern.permute.xlu0 0
        %200 = vperm.xlu0 %199, %v197
        %v201 = vpop.permute.xlu0 %200
        %v203 = vmul.f32 %v196, %v201
        %204 = vst [vmem:[%s191] sm:$0xff] %v203
        %s205 = sand.u32 %s95, 1
        %s206 = scalar_lea.sflag [#allocation4], %s205
        %s207 = sand.u32 %s95, 1
        %s208 = smul.addr %s207, 8
        %s209 = scalar_lea.vmem [#allocation5], %s208
        // Predicated region
        $region33: #{tpu_custom_call.1} parent=27 // pred_check
          %p210 = pneg %p105
        $region34: #{tpu_custom_call.1} parent=27 // pred_check_branch
          %212 = sbr.rel (%p210) target = $region36
        $region35: #{tpu_custom_call.1} parent=27 // pred_region
          %214 = vsyncadd %s206, 0
          %s215 = smul.addr %s23, 2
          %s216 = sadd.s32 %s24, %s215
          %s217 = smul.addr %s216, 8
          %s218 = scalar_lea.hbm %s2, %s217
          %s220 = sshll.u32 %s209, 4
          %s221 = int_to_ptr.vmem [resolvable:$true] %s220
          %s222 = sshll.u32 %s218, 4
          %s223 = int_to_ptr.hbm [resolvable:$true] %s222
          %225 = dma.vmem_to_hbm [thread:$0]  %s221, 128, %s223, %s206
        $region36: #{tpu_custom_call.1} parent=27 // pred_fallthru
          _
      $region28: #{tpu_custom_call.1} parent=5 // pred_fallthru
        _
      %p226 = scmp.le.s32.totalorder 2, %s14
      // Predicated region
      $region37: #{tpu_custom_call.1} parent=5 // pred_check
        %p227 = pneg %p226
      $region38: #{tpu_custom_call.1} parent=5 // pred_check_branch
        %229 = sbr.rel (%p227) target = $region40
      $region39: #{tpu_custom_call.1} parent=5 // pred_region
        %s230 = ssub.s32 %s14, 2
        // Predicated region
        $region41: #{tpu_custom_call.1} parent=39 // pred_check
          %p231 = pneg %p111
        $region42: #{tpu_custom_call.1} parent=39 // pred_check_branch
          %233 = sbr.rel (%p231) target = $region44
        $region43: #{tpu_custom_call.1} parent=39 // pred_region
          %s234 = sand.u32 %s96, 1
          %s235 = scalar_lea.sflag [#allocation4], %s234
          %s236 = sand.u32 %s96, 1
          %s237 = smul.addr %s236, 8
          %s238 = scalar_lea.vmem [#allocation5], %s237
          %240 = dma.done %s235, 128
        $region44: #{tpu_custom_call.1} parent=39 // pred_fallthru
          _
      $region40: #{tpu_custom_call.1} parent=5 // pred_fallthru
        _
    $region6: #{tpu_custom_call.1} parent=1 // loop_footer
      %s18 = sadd.s32 1, %s14
    $region7: #{tpu_custom_call.1} parent=1 // loop_footer_branch
      %13 = sbr.rel target = $region3
    $region8: #{tpu_custom_call.1} parent=1 // loop_exit
      _
    %241 = vsyncpa [#allocation3], 1
    %s242 = scalar_lea.sflag [#allocation3], 1
    %243 = vsyncpa %s242, 1
    %244 = vsyncpa [#allocation4], 1
    %s245 = scalar_lea.sflag [#allocation4], 1
    %246 = vsyncpa %s245, 1

</llo_original>
